<compile_context>
chip_gen: v6e
topology: v6e:2x2x1
jax: 0.10.0
libtpu: 0.0.40
codegen_flags: <defaults>
</compile_context>

<pallas_src>
import functools

import jax
import jax.numpy as jnp
from jax import lax
from jax.experimental import pallas as pl
from jax.experimental.pallas import tpu as pltpu

HIDDEN = 32
LANE = 128
STRIP = 512          # inner compute strip (lanes); keeps h1/h2 in vregs


def _round_up(x: int, m: int) -> int:
    return ((x + m - 1) // m) * m


def policy_net_kernel(x_ref, w1_ref, b1_ref, w2_ref, b2_ref, wh_ref, bh_ref,
                      w_out_ref, c_out_ref, *, n_strips: int, strip: int):
    # Hoist weights once per grid step (they are tiny and vreg/VMEM resident).
    w1 = w1_ref[...]   # (32, 1)
    b1 = b1_ref[...]   # (32, 1)
    w2 = w2_ref[...]   # (32, 32)
    b2 = b2_ref[...]   # (32, 1)
    wh = wh_ref[...]   # (2, 32)   fused [w_head; c_head]
    bh = bh_ref[...]   # (2, 1)

    def strip_body(s, carry):
        col = pl.multiple_of(s * strip, strip)
        xs = x_ref[:, pl.ds(col, strip)]                       # (1, S)

        # fc1: in_features = 1 -> rank-1 outer product on the VPU.
        h1 = jnp.maximum(w1 * xs + b1, 0.0)                    # (32, S)

        # fc2: (32, 32) @ (32, S) on the MXU, f32 accumulate.
        h2 = jnp.dot(w2, h1, preferred_element_type=jnp.float32)
        h2 = jnp.maximum(h2 + b2, 0.0)                         # (32, S)

        # Fused heads: (2, 32) @ (32, S) + (2, 1) -> (2, S)
        hd = jnp.dot(wh, h2, preferred_element_type=jnp.float32) + bh

        # Row 0 -> sigmoid (investment fraction w), row 1 -> relu (consumption c).
        w_out_ref[:, pl.ds(col, strip)] = jax.nn.sigmoid(hd[0:1, :])
        c_out_ref[:, pl.ds(col, strip)] = jnp.maximum(hd[1:2, :], 0.0)
        return carry

    lax.fori_loop(0, n_strips, strip_body, 0, unroll=True)


def _batch_semantics(n_blocks: int):
    """Shard the batch grid axis across both TensorCores on v7x only."""
    try:
        kind = jax.devices()[0].device_kind.lower()
    except Exception:
        kind = ""
    if "v7" in kind and n_blocks >= 2 and hasattr(pltpu, "CORE_PARALLEL"):
        return (pltpu.CORE_PARALLEL,)
    return ("parallel",)


@functools.partial(jax.jit, static_argnames=("max_tb",))
def policy_net_forward(W, params, max_tb: int = 8192):
    """W: (B, 1) or (B,) float32 wealth.  Returns (w, c), each shape (B,)."""
    W = jnp.asarray(W, jnp.float32)
    B = W.shape[0]
    x = W.reshape(1, -1)                 # (1, B): degenerate-dim reshape, no copy

    # Batch tile: multiple of STRIP (hence of 128 lanes), capped at max_tb.
    max_tb = max(STRIP, _round_up(max_tb, STRIP))
    TB = min(max_tb, _round_up(B, STRIP))

    # Only pad when the whole batch is smaller than one tile (block must not
    # exceed the array extent).  Large B runs unpadded; the ragged last grid
    # block is clipped/masked by Pallas.
    B_pad = TB if B < TB else B
    if B_pad != B:
        x = jnp.pad(x, ((0, 0), (0, B_pad - B)))

    n_blocks = pl.cdiv(B_pad, TB)
    n_strips = TB // STRIP

    batch_in = pl.BlockSpec((1, TB), lambda i: (0, i))
    batch_out = pl.BlockSpec((1, TB), lambda i: (0, i))
    # Weights/biases: full-array blocks, constant index_map -> resident in VMEM.
    const = lambda shape: pl.BlockSpec(shape, lambda i: (0,) * len(shape))

    kernel = functools.partial(policy_net_kernel, n_strips=n_strips, strip=STRIP)

    w_out, c_out = pl.pallas_call(
        kernel,
        out_shape=(jax.ShapeDtypeStruct((1, B_pad), jnp.float32),
                   jax.ShapeDtypeStruct((1, B_pad), jnp.float32)),
        grid=(n_blocks,),
        in_specs=[
            batch_in,
            const((HIDDEN, 1)), const((HIDDEN, 1)),       # fc1 w, b
            const((HIDDEN, HIDDEN)), const((HIDDEN, 1)),  # fc2 w, b
            const((2, HIDDEN)), const((2, 1)),            # fused heads w, b
        ],
        out_specs=(batch_out, batch_out),
        compiler_params=pltpu.CompilerParams(
            dimension_semantics=_batch_semantics(n_blocks),
            vmem_limit_bytes=32 * 1024 * 1024),
    )(
        x,
        params["fc1_w"], params["fc1_b"],
        params["fc2_w"], params["fc2_b"],
        params["head_w"], params["head_b"],
    )

    # (1, B) -> (B,) is a free degenerate-dim reshape; slice only if we padded.
    w = w_out.reshape(-1)
    c = c_out.reshape(-1)
    if B_pad != B:
        w = w[:B]
        c = c[:B]
    return w, c


def init_params(key):
    """Deterministic init mimicking PyTorch nn.Linear default:
    U(-1/sqrt(fan_in), 1/sqrt(fan_in)).  Weights kept in (out, in) orientation;
    biases stored as (out, 1) columns; the two heads are fused into a single
    (2, 32) weight / (2, 1) bias."""
    ks = jax.random.split(key, 8)

    def uni(k, shape, fan_in):
        bound = 1.0 / jnp.sqrt(jnp.float32(fan_in))
        return jax.random.uniform(k, shape, jnp.float32, -bound, bound)

    wh_w = uni(ks[4], (1, HIDDEN), HIDDEN)
    wh_b = uni(ks[5], (1, 1), HIDDEN)
    ch_w = uni(ks[6], (1, HIDDEN), HIDDEN)
    ch_b = uni(ks[7], (1, 1), HIDDEN)

    return {
        "fc1_w": uni(ks[0], (HIDDEN, 1), 1),
        "fc1_b": uni(ks[1], (HIDDEN, 1), 1),
        "fc2_w": uni(ks[2], (HIDDEN, HIDDEN), HIDDEN),
        "fc2_b": uni(ks[3], (HIDDEN, 1), HIDDEN),
        "head_w": jnp.concatenate([wh_w, ch_w], axis=0),   # (2, 32)
        "head_b": jnp.concatenate([wh_b, ch_b], axis=0),   # (2, 1)
    }


def reference_forward(W, params):
    """Plain-JAX reference of the PyTorch forward for sanity checking."""
    x = jnp.asarray(W, jnp.float32).reshape(-1, 1)                 # (B, 1)
    h1 = jnp.maximum(x @ params["fc1_w"].T + params["fc1_b"].T, 0.0)
    h2 = jnp.maximum(h1 @ params["fc2_w"].T + params["fc2_b"].T, 0.0)
    heads = h2 @ params["head_w"].T + params["head_b"].T           # (B, 2)
    w = jax.nn.sigmoid(heads[:, 0])
    c = jnp.maximum(heads[:, 1], 0.0)
    return w, c


if __name__ == "__main__":
    key = jax.random.PRNGKey(0)
    k_param, k_in1, k_in2, k_in3 = jax.random.split(key, 4)

    params = init_params(k_param)

    # Small test (B=8), shape (B, 1) as implied by nn.Linear(1, 32).
    B = 8
    W = jax.random.uniform(k_in1, (B, 1), jnp.float32, 0.5, 2.0)
    w_pi, c = policy_net_forward(W, params)
    w_pi = jax.block_until_ready(w_pi)
    c = jax.block_until_ready(c)
    w_ref, c_ref = reference_forward(W, params)
    assert w_pi.shape == (B,) and c.shape == (B,)
    assert jnp.allclose(w_pi, w_ref, atol=1e-5, rtol=1e-5)
    assert jnp.allclose(c, c_ref, atol=1e-5, rtol=1e-5)

    # Non-aligned batch smaller than one tile (pad-to-tile path, grid=1).
    B2 = 1000
    W2 = jax.random.uniform(k_in2, (B2, 1), jnp.float32, 0.5, 2.0)
    w2, c2 = policy_net_forward(W2, params)
    w2 = jax.block_until_ready(w2)
    c2 = jax.block_until_ready(c2)
    w2_ref, c2_ref = reference_forward(W2, params)
    assert w2.shape == (B2,) and c2.shape == (B2,)
    assert jnp.allclose(w2, w2_ref, atol=1e-5, rtol=1e-5)
    assert jnp.allclose(c2, c2_ref, atol=1e-5, rtol=1e-5)

    # Multi-block batch with a ragged (masked) last block: no padding, no slices.
    B3 = 20000
    W3 = jax.random.uniform(k_in3, (B3, 1), jnp.float32, 0.5, 2.0)
    w3, c3 = policy_net_forward(W3, params)
    w3 = jax.block_until_ready(w3)
    c3 = jax.block_until_ready(c3)
    w3_ref, c3_ref = reference_forward(W3, params)
    assert w3.shape == (B3,) and c3.shape == (B3,)
    assert jnp.allclose(w3, w3_ref, atol=1e-5, rtol=1e-5)
    assert jnp.allclose(c3, c3_ref, atol=1e-5, rtol=1e-5)

    print("KERNEL_OK")
</pallas_src>

<mosaic_0001>
module attributes {stable_mosaic.version = 11 : i64} {
  func.func @policy_net_kernel(%arg0: i32, %arg1: memref<1x512xf32, #tpu.memory_space<vmem>>, %arg2: memref<32x1xf32, #tpu.memory_space<vmem>>, %arg3: memref<32x1xf32, #tpu.memory_space<vmem>>, %arg4: memref<32x32xf32, #tpu.memory_space<vmem>>, %arg5: memref<32x1xf32, #tpu.memory_space<vmem>>, %arg6: memref<2x32xf32, #tpu.memory_space<vmem>>, %arg7: memref<2x1xf32, #tpu.memory_space<vmem>>, %arg8: memref<1x512xf32, #tpu.memory_space<vmem>>, %arg9: memref<1x512xf32, #tpu.memory_space<vmem>>) attributes {dimension_semantics = [#tpu.dimension_semantics<parallel>], iteration_bounds = array<i64: 1>, scalar_prefetch = 0 : i64, scratch_operands = 0 : i64, tpu.core_type = #tpu.core_type<tc>, window_params = [{transform_indices = @transform_0, window_bounds = array<i64: 1, 512>}, {pipeline_mode = #tpu.pipeline_mode<synchronous>, transform_indices = @transform_1, window_bounds = array<i64: 32, 1>}, {pipeline_mode = #tpu.pipeline_mode<synchronous>, transform_indices = @transform_2, window_bounds = array<i64: 32, 1>}, {pipeline_mode = #tpu.pipeline_mode<synchronous>, transform_indices = @transform_3, window_bounds = array<i64: 32, 32>}, {pipeline_mode = #tpu.pipeline_mode<synchronous>, transform_indices = @transform_4, window_bounds = array<i64: 32, 1>}, {pipeline_mode = #tpu.pipeline_mode<synchronous>, transform_indices = @transform_5, window_bounds = array<i64: 2, 32>}, {pipeline_mode = #tpu.pipeline_mode<synchronous>, transform_indices = @transform_6, window_bounds = array<i64: 2, 1>}, {transform_indices = @transform_7, window_bounds = array<i64: 1, 512>}, {transform_indices = @transform_8, window_bounds = array<i64: 1, 512>}]} {
    %c0 = arith.constant 0 : index
    %c0_0 = arith.constant 0 : index
    %0 = vector.load %arg2[%c0, %c0_0] : memref<32x1xf32, #tpu.memory_space<vmem>>, vector<32x1xf32>
    %c0_1 = arith.constant 0 : index
    %c0_2 = arith.constant 0 : index
    %1 = vector.load %arg3[%c0_1, %c0_2] : memref<32x1xf32, #tpu.memory_space<vmem>>, vector<32x1xf32>
    %c0_3 = arith.constant 0 : index
    %c0_4 = arith.constant 0 : index
    %2 = vector.load %arg4[%c0_3, %c0_4] : memref<32x32xf32, #tpu.memory_space<vmem>>, vector<32x32xf32>
    %c0_5 = arith.constant 0 : index
    %c0_6 = arith.constant 0 : index
    %3 = vector.load %arg5[%c0_5, %c0_6] : memref<32x1xf32, #tpu.memory_space<vmem>>, vector<32x1xf32>
    %c0_7 = arith.constant 0 : index
    %c0_8 = arith.constant 0 : index
    %4 = vector.load %arg6[%c0_7, %c0_8] : memref<2x32xf32, #tpu.memory_space<vmem>>, vector<2x32xf32>
    %c0_9 = arith.constant 0 : index
    %c0_10 = arith.constant 0 : index
    %5 = vector.load %arg7[%c0_9, %c0_10] : memref<2x1xf32, #tpu.memory_space<vmem>>, vector<2x1xf32>
    %c0_i32 = arith.constant 0 : i32
    %c512_i32 = arith.constant 512 : i32
    %6 = arith.muli %c0_i32, %c512_i32 : i32
    %7 = tpu.assume_multiple %6, 512 : i32
    %c0_11 = arith.constant 0 : index
    %8 = arith.index_cast %7 : i32 to index
    %9 = vector.load %arg1[%c0_11, %8] : memref<1x512xf32, #tpu.memory_space<vmem>>, vector<1x512xf32>
    %10 = vector.broadcast %0 : vector<32x1xf32> to vector<32x512xf32>
    %11 = vector.broadcast %9 : vector<1x512xf32> to vector<32x512xf32>
    %12 = arith.mulf %10, %11 : vector<32x512xf32>
    %13 = vector.broadcast %1 : vector<32x1xf32> to vector<32x512xf32>
    %14 = arith.addf %12, %13 : vector<32x512xf32>
    %cst = arith.constant 0.000000e+00 : f32
    %15 = vector.broadcast %cst : f32 to vector<32x512xf32>
    %16 = arith.maximumf %14, %15 : vector<32x512xf32>
    %cst_12 = arith.constant dense<0.000000e+00> : vector<32x512xf32>
    %17 = tpu.matmul %2, %16, %cst_12 {dimension_numbers = #tpu.dot_dimension_numbers<[1], [0], [0], [1], [0, 0, 1, 1], [], []>} : vector<32x32xf32>, vector<32x512xf32>, vector<32x512xf32> -> vector<32x512xf32>
    %18 = vector.broadcast %3 : vector<32x1xf32> to vector<32x512xf32>
    %19 = arith.addf %17, %18 : vector<32x512xf32>
    %cst_13 = arith.constant 0.000000e+00 : f32
    %20 = vector.broadcast %cst_13 : f32 to vector<32x512xf32>
    %21 = arith.maximumf %19, %20 : vector<32x512xf32>
    %cst_14 = arith.constant dense<0.000000e+00> : vector<2x512xf32>
    %22 = tpu.matmul %4, %21, %cst_14 {dimension_numbers = #tpu.dot_dimension_numbers<[1], [0], [0], [1], [0, 0, 1, 1], [], []>} : vector<2x32xf32>, vector<32x512xf32>, vector<2x512xf32> -> vector<2x512xf32>
    %23 = vector.broadcast %5 : vector<2x1xf32> to vector<2x512xf32>
    %24 = arith.addf %22, %23 : vector<2x512xf32>
    %25 = vector.extract_strided_slice %24 {offsets = [0, 0], sizes = [1, 512], strides = [1, 1]} : vector<2x512xf32> to vector<1x512xf32>
    %26 = arith.negf %25 : vector<1x512xf32>
    %27 = math.exp %26 : vector<1x512xf32>
    %cst_15 = arith.constant 1.000000e+00 : f32
    %28 = vector.broadcast %cst_15 : f32 to vector<1x512xf32>
    %29 = arith.addf %28, %27 : vector<1x512xf32>
    %30 = arith.divf %28, %29 : vector<1x512xf32>
    %c0_16 = arith.constant 0 : index
    %31 = arith.index_cast %7 : i32 to index
    %32 = vector.load %arg8[%c0_16, %31] : memref<1x512xf32, #tpu.memory_space<vmem>>, vector<1x512xf32>
    tpu.vector_store %arg8[%c0_16, %31], %30 {strides = array<i32>} : memref<1x512xf32, #tpu.memory_space<vmem>>, vector<1x512xf32>,
    %33 = vector.extract_strided_slice %24 {offsets = [1, 0], sizes = [1, 512], strides = [1, 1]} : vector<2x512xf32> to vector<1x512xf32>
    %cst_17 = arith.constant 0.000000e+00 : f32
    %34 = vector.broadcast %cst_17 : f32 to vector<1x512xf32>
    %35 = arith.maximumf %33, %34 : vector<1x512xf32>
    %c0_18 = arith.constant 0 : index
    %36 = arith.index_cast %7 : i32 to index
    %37 = vector.load %arg9[%c0_18, %36] : memref<1x512xf32, #tpu.memory_space<vmem>>, vector<1x512xf32>
    tpu.vector_store %arg9[%c0_18, %36], %35 {strides = array<i32>} : memref<1x512xf32, #tpu.memory_space<vmem>>, vector<1x512xf32>,
    %c1_i32 = arith.constant 1 : i32
    return
  }
  func.func @transform_0(%arg0: i32) -> (i32, i32) {
    %c0_i32 = arith.constant 0 : i32
    %c0_i32_0 = arith.constant 0 : i32
    return %c0_i32, %arg0 : i32, i32
  }
  func.func @transform_1(%arg0: i32) -> (i32, i32) {
    %c0_i32 = arith.constant 0 : i32
    %c0_i32_0 = arith.constant 0 : i32
    %c0_i32_1 = arith.constant 0 : i32
    return %c0_i32, %c0_i32_0 : i32, i32
  }
  func.func @transform_2(%arg0: i32) -> (i32, i32) {
    %c0_i32 = arith.constant 0 : i32
    %c0_i32_0 = arith.constant 0 : i32
    %c0_i32_1 = arith.constant 0 : i32
    return %c0_i32, %c0_i32_0 : i32, i32
  }
  func.func @transform_3(%arg0: i32) -> (i32, i32) {
    %c0_i32 = arith.constant 0 : i32
    %c0_i32_0 = arith.constant 0 : i32
    %c0_i32_1 = arith.constant 0 : i32
    return %c0_i32, %c0_i32_0 : i32, i32
  }
  func.func @transform_4(%arg0: i32) -> (i32, i32) {
    %c0_i32 = arith.constant 0 : i32
    %c0_i32_0 = arith.constant 0 : i32
    %c0_i32_1 = arith.constant 0 : i32
    return %c0_i32, %c0_i32_0 : i32, i32
  }
  func.func @transform_5(%arg0: i32) -> (i32, i32) {
    %c0_i32 = arith.constant 0 : i32
    %c0_i32_0 = arith.constant 0 : i32
    %c0_i32_1 = arith.constant 0 : i32
    return %c0_i32, %c0_i32_0 : i32, i32
  }
  func.func @transform_6(%arg0: i32) -> (i32, i32) {
    %c0_i32 = arith.constant 0 : i32
    %c0_i32_0 = arith.constant 0 : i32
    %c0_i32_1 = arith.constant 0 : i32
    return %c0_i32, %c0_i32_0 : i32, i32
  }
  func.func @transform_7(%arg0: i32) -> (i32, i32) {
    %c0_i32 = arith.constant 0 : i32
    %c0_i32_0 = arith.constant 0 : i32
    return %c0_i32, %arg0 : i32, i32
  }
  func.func @transform_8(%arg0: i32) -> (i32, i32) {
    %c0_i32 = arith.constant 0 : i32
    %c0_i32_0 = arith.constant 0 : i32
    return %c0_i32, %arg0 : i32, i32
  }
}

</mosaic_0001>

<llo_original>
// kernel: policy_net_forward.1
$region0: #{policy_net_forward.1}
  #allocation0 [shape = 'u32[]', space=smem, size = 0x4, offset = 0x4, fixed_abs, tag = 'smem constant byte address 0x4 - core index']
  #allocation1 [shape = 'u32[144,128]{1,0:T(1,128)}', space=vmem, size = 0x12000, scoped, tag = 'internal scratch']
  %s0 = inlined_call_operand.vmem [shape: f32[1,512], index: 0, kind: input, shape index: {}]
  %s1 = inlined_call_operand.vmem [shape: f32[32,1], index: 1, kind: input, shape index: {}]
  %s2 = inlined_call_operand.vmem [shape: f32[32,1], index: 2, kind: input, shape index: {}]
  %s3 = inlined_call_operand.vmem [shape: f32[32,32], index: 3, kind: input, shape index: {}]
  %s4 = inlined_call_operand.vmem [shape: f32[32,1], index: 4, kind: input, shape index: {}]
  %s5 = inlined_call_operand.vmem [shape: f32[2,32], index: 5, kind: input, shape index: {}]
  %s6 = inlined_call_operand.vmem [shape: f32[2,1], index: 6, kind: input, shape index: {}]
  %s7 = inlined_call_operand.vmem [shape: f32[1,512], index: 7, kind: output, shape index: {0}]
  %s8 = inlined_call_operand.vmem [shape: f32[1,512], index: 8, kind: output, shape index: {1}]
  %9 = xla_tuple %s7, %s8
  %s10 = sld [smem:[#allocation0]]
  $region46: #{policy_net_forward.1} parent=0
    _
  %s12 = ssub.s32 1, %s10
  %s13 = scalar_select 0, %s12, %s10
  // Predicated region
  $region2: #{policy_net_forward.1} parent=0 // pred_check
    _
  $region3: #{policy_net_forward.1} parent=0 // pred_check_branch
    %15 = sbr.rel (0) target = $region5
  $region4: #{policy_net_forward.1} parent=0 // pred_region
    _
  $region5: #{policy_net_forward.1} parent=0 // pred_fallthru
    _
  // Predicated region
  $region6: #{policy_net_forward.1} parent=0 // pred_check
    _
  $region7: #{policy_net_forward.1} parent=0 // pred_check_branch
    %17 = sbr.rel (0) target = $region9
  $region8: #{policy_net_forward.1} parent=0 // pred_region
    _
  $region9: #{policy_net_forward.1} parent=0 // pred_fallthru
    _
  // Predicated region
  $region10: #{policy_net_forward.1} parent=0 // pred_check
    _
  $region11: #{policy_net_forward.1} parent=0 // pred_check_branch
    %19 = sbr.rel (0) target = $region13
  $region12: #{policy_net_forward.1} parent=0 // pred_region
    _
  $region13: #{policy_net_forward.1} parent=0 // pred_fallthru
    _
  // Predicated region
  $region14: #{policy_net_forward.1} parent=0 // pred_check
    _
  $region15: #{policy_net_forward.1} parent=0 // pred_check_branch
    %21 = sbr.rel (0) target = $region17
  $region16: #{policy_net_forward.1} parent=0 // pred_region
    _
  $region17: #{policy_net_forward.1} parent=0 // pred_fallthru
    _
  // Predicated region
  $region18: #{policy_net_forward.1} parent=0 // pred_check
    _
  $region19: #{policy_net_forward.1} parent=0 // pred_check_branch
    %23 = sbr.rel (0) target = $region21
  $region20: #{policy_net_forward.1} parent=0 // pred_region
    _
  $region21: #{policy_net_forward.1} parent=0 // pred_fallthru
    _
  // Predicated region
  $region22: #{policy_net_forward.1} parent=0 // pred_check
    _
  $region23: #{policy_net_forward.1} parent=0 // pred_check_branch
    %25 = sbr.rel (0) target = $region25
  $region24: #{policy_net_forward.1} parent=0 // pred_region
    _
  $region25: #{policy_net_forward.1} parent=0 // pred_fallthru
    _
  // Predicated region
  $region26: #{policy_net_forward.1} parent=0 // pred_check
    _
  $region27: #{policy_net_forward.1} parent=0 // pred_check_branch
    %27 = sbr.rel (0) target = $region29
  $region28: #{policy_net_forward.1} parent=0 // pred_region
    _
  $region29: #{policy_net_forward.1} parent=0 // pred_fallthru
    _
  %v28 = vld [vmem:[%s1] sm:$0xff]
  %v29 = vld [vmem:[%s1 + $0x8] sm:$0xff]
  %v30 = vld [vmem:[%s1 + $0x10] sm:$0xff]
  %v31 = vld [vmem:[%s1 + $0x18] sm:$0xff]
  %v32 = vld [vmem:[%s2] sm:$0xff]
  %v33 = vld [vmem:[%s2 + $0x8] sm:$0xff]
  %v34 = vld [vmem:[%s2 + $0x10] sm:$0xff]
  %v35 = vld [vmem:[%s2 + $0x18] sm:$0xff]
  %v36 = vld [vmem:[%s3] sm:$0xff]
  %v37 = vld [vmem:[%s3 + $0x8] sm:$0xff]
  %v38 = vld [vmem:[%s3 + $0x10] sm:$0xff]
  %v39 = vld [vmem:[%s3 + $0x18] sm:$0xff]
  %v40 = vld [vmem:[%s4] sm:$0xff]
  %v41 = vld [vmem:[%s4 + $0x8] sm:$0xff]
  %v42 = vld [vmem:[%s4 + $0x10] sm:$0xff]
  %v43 = vld [vmem:[%s4 + $0x18] sm:$0xff]
  %v44 = vld [vmem:[%s5] sm:$0x3]
  %v45 = vld [vmem:[%s6] sm:$0x3]
  %v46 = vld [vmem:[%s0] sm:$0xf]
  %48 = vset.pattern.permute.xlu0 0
  %49 = vperm.xlu0 %48, %v28
  %v50 = vpop.permute.xlu0 %49
  %53 = vset.pattern.permute.xlu0 0
  %54 = vperm.xlu0 %53, %v29
  %v55 = vpop.permute.xlu0 %54
  %58 = vset.pattern.permute.xlu0 0
  %59 = vperm.xlu0 %58, %v30
  %v60 = vpop.permute.xlu0 %59
  %63 = vset.pattern.permute.xlu0 0
  %64 = vperm.xlu0 %63, %v31
  %v65 = vpop.permute.xlu0 %64
  %v68 = vlaneseq
  %v69 = vshrl.u32 %v68, 7
  %v70 = vsub.s32 0, %v69
  %v71 = vrot.slane %v46, %v70
  %v72 = vlaneseq
  %v73 = vshrl.u32 %v72, 7
  %v74 = vsub.s32 1, %v73
  %v75 = vrot.slane %v46, %v74
  %v76 = vlaneseq
  %v77 = vshrl.u32 %v76, 7
  %v78 = vsub.s32 2, %v77
  %v79 = vrot.slane %v46, %v78
  %v80 = vlaneseq
  %v81 = vshrl.u32 %v80, 7
  %v82 = vsub.s32 3, %v81
  %v83 = vrot.slane %v46, %v82
  %v88 = vmul.f32 %v50, %v71
  %v89 = vmul.f32 %v50, %v75
  %v90 = vmul.f32 %v50, %v79
  %v91 = vmul.f32 %v50, %v83
  %v92 = vmul.f32 %v55, %v71
  %v93 = vmul.f32 %v55, %v75
  %v94 = vmul.f32 %v55, %v79
  %v95 = vmul.f32 %v55, %v83
  %v96 = vmul.f32 %v60, %v71
  %v97 = vmul.f32 %v60, %v75
  %v98 = vmul.f32 %v60, %v79
  %v99 = vmul.f32 %v60, %v83
  %v100 = vmul.f32 %v65, %v71
  %v101 = vmul.f32 %v65, %v75
  %v102 = vmul.f32 %v65, %v79
  %v103 = vmul.f32 %v65, %v83
  %105 = vset.pattern.permute.xlu0 0
  %106 = vperm.xlu0 %105, %v32
  %v107 = vpop.permute.xlu0 %106
  %110 = vset.pattern.permute.xlu0 0
  %111 = vperm.xlu0 %110, %v33
  %v112 = vpop.permute.xlu0 %111
  %115 = vset.pattern.permute.xlu0 0
  %116 = vperm.xlu0 %115, %v34
  %v117 = vpop.permute.xlu0 %116
  %120 = vset.pattern.permute.xlu0 0
  %121 = vperm.xlu0 %120, %v35
  %v122 = vpop.permute.xlu0 %121
  %v124 = vadd.f32 %v88, %v107
  %v125 = vadd.f32 %v89, %v107
  %v126 = vadd.f32 %v90, %v107
  %v127 = vadd.f32 %v91, %v107
  %v128 = vadd.f32 %v92, %v112
  %v129 = vadd.f32 %v93, %v112
  %v130 = vadd.f32 %v94, %v112
  %v131 = vadd.f32 %v95, %v112
  %v132 = vadd.f32 %v96, %v117
  %v133 = vadd.f32 %v97, %v117
  %v134 = vadd.f32 %v98, %v117
  %v135 = vadd.f32 %v99, %v117
  %v136 = vadd.f32 %v100, %v122
  %v137 = vadd.f32 %v101, %v122
  %v138 = vadd.f32 %v102, %v122
  %v139 = vadd.f32 %v103, %v122
  %v140 = vmax.f32 %v124, 0.0
  %v141 = vmax.f32 %v125, 0.0
  %v142 = vmax.f32 %v126, 0.0
  %v143 = vmax.f32 %v127, 0.0
  %v144 = vmax.f32 %v128, 0.0
  %v145 = vmax.f32 %v129, 0.0
  %v146 = vmax.f32 %v130, 0.0
  %v147 = vmax.f32 %v131, 0.0
  %v148 = vmax.f32 %v132, 0.0
  %v149 = vmax.f32 %v133, 0.0
  %v150 = vmax.f32 %v134, 0.0
  %v151 = vmax.f32 %v135, 0.0
  %v152 = vmax.f32 %v136, 0.0
  %v153 = vmax.f32 %v137, 0.0
  %v154 = vmax.f32 %v138, 0.0
  %v155 = vmax.f32 %v139, 0.0
  %157 = vset.pattern.permute.xlu0 0
  %158 = vperm.xlu0 %157, %v40
  %v159 = vpop.permute.xlu0 %158
  %162 = vset.pattern.permute.xlu0 0
  %163 = vperm.xlu0 %162, %v41
  %v164 = vpop.permute.xlu0 %163
  %167 = vset.pattern.permute.xlu0 0
  %168 = vperm.xlu0 %167, %v42
  %v169 = vpop.permute.xlu0 %168
  %172 = vset.pattern.permute.xlu0 0
  %173 = vperm.xlu0 %172, %v43
  %v174 = vpop.permute.xlu0 %173
  %vm176 = vcmask 261120
  %v178 = vsel %vm176, %v36, 0
  %v181 = vsel %vm176, %v37, 0
  %v184 = vsel %vm176, %v38, 0
  %v187 = vsel %vm176, %v39, 0
  %189 = vmatprep.subr.mxu0 0.0
  %190 = vmatpush1.msra.mxu0 0.0
  %191 = vmatprep.subr.mxu0 0.0
  %192 = vmatpush1.msra.mxu0 0.0
  %193 = vmatprep.subr.mxu0 0.0
  %194 = vmatpush1.msra.mxu0 0.0
  %195 = vmatprep.subr.mxu0 0.0
  %196 = vmatpush1.msra.mxu0 0.0
  %197 = vmatprep.subr.mxu0 0.0
  %198 = vmatpush1.msra.mxu0 0.0
  %199 = vmatprep.subr.mxu0 0.0
  %200 = vmatpush1.msra.mxu0 0.0
  %201 = vmatprep.subr.mxu0 0.0
  %202 = vmatpush1.msra.mxu0 0.0
  %203 = vmatprep.subr.mxu0 0.0
  %204 = vmatpush1.msra.mxu0 0.0
  %205 = vmatprep.subr.mxu0 0.0
  %206 = vmatpush1.msra.mxu0 0.0
  %207 = vmatprep.subr.mxu0 0.0
  %208 = vmatpush1.msra.mxu0 0.0
  %209 = vmatprep.subr.mxu0 0.0
  %210 = vmatpush1.msra.mxu0 0.0
  %211 = vmatprep.subr.mxu0 0.0
  %212 = vmatpush1.msra.mxu0 0.0
  %213 = vmatprep.subr.mxu0 %v153
  %214 = vmatpush1.msra.mxu0 %v152
  %215 = vmatprep.subr.mxu0 %v149
  %216 = vmatpush1.msra.mxu0 %v148
  %217 = vmatprep.subr.mxu0 %v145
  %218 = vmatpush1.msra.mxu0 %v144
  %219 = vmatprep.subr.mxu0 %v141
  %220 = vmatpush1.msra.mxu0 %v140
  %221 = vmatprep.subr.mxu0 0.0
  %222 = vmatpush2.msra.mxu0 0.0
  %223 = vmatprep.subr.mxu0 0.0
  %224 = vmatpush2.msra.mxu0 0.0
  %225 = vmatprep.subr.mxu0 0.0
  %226 = vmatpush2.msra.mxu0 0.0
  %227 = vmatprep.subr.mxu0 0.0
  %228 = vmatpush2.msra.mxu0 0.0
  %229 = vmatprep.subr.mxu0 0.0
  %230 = vmatpush2.msra.mxu0 0.0
  %231 = vmatprep.subr.mxu0 0.0
  %232 = vmatpush2.msra.mxu0 0.0
  %233 = vmatprep.subr.mxu0 0.0
  %234 = vmatpush2.msra.mxu0 0.0
  %235 = vmatprep.subr.mxu0 0.0
  %236 = vmatpush2.msra.mxu0 0.0
  %237 = vmatprep.subr.mxu0 0.0
  %238 = vmatpush2.msra.mxu0 0.0
  %239 = vmatprep.subr.mxu0 0.0
  %240 = vmatpush2.msra.mxu0 0.0
  %241 = vmatprep.subr.mxu0 0.0
  %242 = vmatpush2.msra.mxu0 0.0
  %243 = vmatprep.subr.mxu0 0.0
  %244 = vmatpush2.msra.mxu0 0.0
  %245 = vmatprep.subr.mxu0 0.0
  %246 = vmatpush2.msra.mxu0 0.0
  %247 = vmatprep.subr.mxu0 0.0
  %248 = vmatpush2.msra.mxu0 0.0
  %249 = vmatprep.subr.mxu0 0.0
  %250 = vmatpush2.msra.mxu0 0.0
  %251 = vmatprep.subr.mxu0 0.0
  %252 = vmatpush2.msra.mxu0 0.0
  %253 = vmatprep.mubr.f32.mxu0 0.0
  %254 = vmatmul.mubr.f32.gmra.mxu0 %v178
  %v255 = vpop.f32.mrf.mxu0
  %v256 = vadd.f32 %v159, %v255
  %v257 = vpop.f32.mrf.mxu0
  %v258 = vadd.f32 %v159, %v257
  %259 = vmatprep.mubr.f32.mxu0 0.0
  %260 = vmatmul.mubr.f32.gmra.mxu0 %v181
  %v261 = vpop.f32.mrf.mxu0
  %v262 = vadd.f32 %v164, %v261
  %v263 = vpop.f32.mrf.mxu0
  %v264 = vadd.f32 %v164, %v263
  %265 = vmatprep.mubr.f32.mxu0 0.0
  %266 = vmatmul.mubr.f32.gmra.mxu0 %v184
  %v267 = vpop.f32.mrf.mxu0
  %v268 = vadd.f32 %v169, %v267
  %v269 = vpop.f32.mrf.mxu0
  %v270 = vadd.f32 %v169, %v269
  %271 = vmatprep.mubr.f32.mxu0 0.0
  %272 = vmatmul.mubr.f32.gmra.mxu0 %v187
  %v273 = vpop.f32.mrf.mxu0
  %v274 = vadd.f32 %v174, %v273
  %v275 = vpop.f32.mrf.mxu0
  %v276 = vadd.f32 %v174, %v275
  %277 = vdwg.mxu0
  %278 = vmatprep.subr.mxu0 0.0
  %279 = vmatpush1.msra.mxu0 0.0
  %280 = vmatprep.subr.mxu0 0.0
  %281 = vmatpush1.msra.mxu0 0.0
  %282 = vmatprep.subr.mxu0 0.0
  %283 = vmatpush1.msra.mxu0 0.0
  %284 = vmatprep.subr.mxu0 0.0
  %285 = vmatpush1.msra.mxu0 0.0
  %286 = vmatprep.subr.mxu0 0.0
  %287 = vmatpush1.msra.mxu0 0.0
  %288 = vmatprep.subr.mxu0 0.0
  %289 = vmatpush1.msra.mxu0 0.0
  %290 = vmatprep.subr.mxu0 0.0
  %291 = vmatpush1.msra.mxu0 0.0
  %292 = vmatprep.subr.mxu0 0.0
  %293 = vmatpush1.msra.mxu0 0.0
  %294 = vmatprep.subr.mxu0 0.0
  %295 = vmatpush1.msra.mxu0 0.0
  %296 = vmatprep.subr.mxu0 0.0
  %297 = vmatpush1.msra.mxu0 0.0
  %298 = vmatprep.subr.mxu0 0.0
  %299 = vmatpush1.msra.mxu0 0.0
  %300 = vmatprep.subr.mxu0 0.0
  %301 = vmatpush1.msra.mxu0 0.0
  %302 = vmatprep.subr.mxu0 %v155
  %303 = vmatpush1.msra.mxu0 %v154
  %304 = vmatprep.subr.mxu0 %v151
  %305 = vmatpush1.msra.mxu0 %v150
  %306 = vmatprep.subr.mxu0 %v147
  %307 = vmatpush1.msra.mxu0 %v146
  %308 = vmatprep.subr.mxu0 %v143
  %309 = vmatpush1.msra.mxu0 %v142
  %310 = vmatprep.subr.mxu0 0.0
  %311 = vmatpush2.msra.mxu0 0.0
  %312 = vmatprep.subr.mxu0 0.0
  %313 = vmatpush2.msra.mxu0 0.0
  %314 = vmatprep.subr.mxu0 0.0
  %315 = vmatpush2.msra.mxu0 0.0
  %316 = vmatprep.subr.mxu0 0.0
  %317 = vmatpush2.msra.mxu0 0.0
  %318 = vmatprep.subr.mxu0 0.0
  %319 = vmatpush2.msra.mxu0 0.0
  %320 = vmatprep.subr.mxu0 0.0
  %321 = vmatpush2.msra.mxu0 0.0
  %322 = vmatprep.subr.mxu0 0.0
  %323 = vmatpush2.msra.mxu0 0.0
  %324 = vmatprep.subr.mxu0 0.0
  %325 = vmatpush2.msra.mxu0 0.0
  %326 = vmatprep.subr.mxu0 0.0
  %327 = vmatpush2.msra.mxu0 0.0
  %328 = vmatprep.subr.mxu0 0.0
  %329 = vmatpush2.msra.mxu0 0.0
  %330 = vmatprep.subr.mxu0 0.0
  %331 = vmatpush2.msra.mxu0 0.0
  %332 = vmatprep.subr.mxu0 0.0
  %333 = vmatpush2.msra.mxu0 0.0
  %334 = vmatprep.subr.mxu0 0.0
  %335 = vmatpush2.msra.mxu0 0.0
  %336 = vmatprep.subr.mxu0 0.0
  %337 = vmatpush2.msra.mxu0 0.0
  %338 = vmatprep.subr.mxu0 0.0
  %339 = vmatpush2.msra.mxu0 0.0
  %340 = vmatprep.subr.mxu0 0.0
  %341 = vmatpush2.msra.mxu0 0.0
  %342 = vmatprep.mubr.f32.mxu0 0.0
  %343 = vmatmul.mubr.f32.gmra.mxu0 %v178
  %v344 = vpop.f32.mrf.mxu0
  %v345 = vadd.f32 %v159, %v344
  %v346 = vpop.f32.mrf.mxu0
  %v347 = vadd.f32 %v159, %v346
  %348 = vmatprep.mubr.f32.mxu0 0.0
  %349 = vmatmul.mubr.f32.gmra.mxu0 %v181
  %v350 = vpop.f32.mrf.mxu0
  %v351 = vadd.f32 %v164, %v350
  %v352 = vpop.f32.mrf.mxu0
  %v353 = vadd.f32 %v164, %v352
  %354 = vmatprep.mubr.f32.mxu0 0.0
  %355 = vmatmul.mubr.f32.gmra.mxu0 %v184
  %v356 = vpop.f32.mrf.mxu0
  %v357 = vadd.f32 %v169, %v356
  %v358 = vpop.f32.mrf.mxu0
  %v359 = vadd.f32 %v169, %v358
  %360 = vmatprep.mubr.f32.mxu0 0.0
  %361 = vmatmul.mubr.f32.gmra.mxu0 %v187
  %v362 = vpop.f32.mrf.mxu0
  %v363 = vadd.f32 %v174, %v362
  %v364 = vpop.f32.mrf.mxu0
  %v365 = vadd.f32 %v174, %v364
  %366 = vdwg.mxu0
  %v367 = vmax.f32 %v256, 0.0
  %v368 = vmax.f32 %v258, 0.0
  %v369 = vmax.f32 %v345, 0.0
  %v370 = vmax.f32 %v347, 0.0
  %v371 = vmax.f32 %v262, 0.0
  %v372 = vmax.f32 %v264, 0.0
  %v373 = vmax.f32 %v351, 0.0
  %v374 = vmax.f32 %v353, 0.0
  %v375 = vmax.f32 %v268, 0.0
  %v376 = vmax.f32 %v270, 0.0
  %v377 = vmax.f32 %v357, 0.0
  %v378 = vmax.f32 %v359, 0.0
  %v379 = vmax.f32 %v274, 0.0
  %v380 = vmax.f32 %v276, 0.0
  %v381 = vmax.f32 %v363, 0.0
  %v382 = vmax.f32 %v365, 0.0
  %384 = vset.pattern.permute.xlu0 0
  %385 = vperm.xlu0 %384, %v45
  %v386 = vpop.permute.xlu0 %385
  %v389 = vsel %vm176, %v44, 0
  %391 = vmatprep.subr.mxu0 0.0
  %392 = vmatpush1.msra.mxu0 0.0
  %393 = vmatprep.subr.mxu0 0.0
  %394 = vmatpush1.msra.mxu0 0.0
  %395 = vmatprep.subr.mxu0 0.0
  %396 = vmatpush1.msra.mxu0 0.0
  %397 = vmatprep.subr.mxu0 0.0
  %398 = vmatpush1.msra.mxu0 0.0
  %399 = vmatprep.subr.mxu0 0.0
  %400 = vmatpush1.msra.mxu0 0.0
  %401 = vmatprep.subr.mxu0 0.0
  %402 = vmatpush1.msra.mxu0 0.0
  %403 = vmatprep.subr.mxu0 0.0
  %404 = vmatpush1.msra.mxu0 0.0
  %405 = vmatprep.subr.mxu0 0.0
  %406 = vmatpush1.msra.mxu0 0.0
  %407 = vmatprep.subr.mxu0 0.0
  %408 = vmatpush1.msra.mxu0 0.0
  %409 = vmatprep.subr.mxu0 0.0
  %410 = vmatpush1.msra.mxu0 0.0
  %411 = vmatprep.subr.mxu0 0.0
  %412 = vmatpush1.msra.mxu0 0.0
  %413 = vmatprep.subr.mxu0 0.0
  %414 = vmatpush1.msra.mxu0 0.0
  %415 = vmatprep.subr.mxu0 %v380
  %416 = vmatpush1.msra.mxu0 %v379
  %417 = vmatprep.subr.mxu0 %v376
  %418 = vmatpush1.msra.mxu0 %v375
  %419 = vmatprep.subr.mxu0 %v372
  %420 = vmatpush1.msra.mxu0 %v371
  %421 = vmatprep.subr.mxu0 %v368
  %422 = vmatpush1.msra.mxu0 %v367
  %423 = vmatprep.subr.mxu0 0.0
  %424 = vmatpush2.msra.mxu0 0.0
  %425 = vmatprep.subr.mxu0 0.0
  %426 = vmatpush2.msra.mxu0 0.0
  %427 = vmatprep.subr.mxu0 0.0
  %428 = vmatpush2.msra.mxu0 0.0
  %429 = vmatprep.subr.mxu0 0.0
  %430 = vmatpush2.msra.mxu0 0.0
  %431 = vmatprep.subr.mxu0 0.0
  %432 = vmatpush2.msra.mxu0 0.0
  %433 = vmatprep.subr.mxu0 0.0
  %434 = vmatpush2.msra.mxu0 0.0
  %435 = vmatprep.subr.mxu0 0.0
  %436 = vmatpush2.msra.mxu0 0.0
  %437 = vmatprep.subr.mxu0 0.0
  %438 = vmatpush2.msra.mxu0 0.0
  %439 = vmatprep.subr.mxu0 0.0
  %440 = vmatpush2.msra.mxu0 0.0
  %441 = vmatprep.subr.mxu0 0.0
  %442 = vmatpush2.msra.mxu0 0.0
  %443 = vmatprep.subr.mxu0 0.0
  %444 = vmatpush2.msra.mxu0 0.0
  %445 = vmatprep.subr.mxu0 0.0
  %446 = vmatpush2.msra.mxu0 0.0
  %447 = vmatprep.subr.mxu0 0.0
  %448 = vmatpush2.msra.mxu0 0.0
  %449 = vmatprep.subr.mxu0 0.0
  %450 = vmatpush2.msra.mxu0 0.0
  %451 = vmatprep.subr.mxu0 0.0
  %452 = vmatpush2.msra.mxu0 0.0
  %453 = vmatprep.subr.mxu0 0.0
  %454 = vmatpush2.msra.mxu0 0.0
  %455 = vmatprep.mubr.f32.mxu0 0.0
  %456 = vmatmul.mubr.f32.gmra.mxu0 %v389
  %v457 = vpop.f32.mrf.mxu0
  %v458 = vadd.f32 %v386, %v457
  %v459 = vpop.f32.mrf.mxu0
  %v460 = vadd.f32 %v386, %v459
  %461 = vdwg.mxu0
  %462 = vmatprep.subr.mxu0 0.0
  %463 = vmatpush1.msra.mxu0 0.0
  %464 = vmatprep.subr.mxu0 0.0
  %465 = vmatpush1.msra.mxu0 0.0
  %466 = vmatprep.subr.mxu0 0.0
  %467 = vmatpush1.msra.mxu0 0.0
  %468 = vmatprep.subr.mxu0 0.0
  %469 = vmatpush1.msra.mxu0 0.0
  %470 = vmatprep.subr.mxu0 0.0
  %471 = vmatpush1.msra.mxu0 0.0
  %472 = vmatprep.subr.mxu0 0.0
  %473 = vmatpush1.msra.mxu0 0.0
  %474 = vmatprep.subr.mxu0 0.0
  %475 = vmatpush1.msra.mxu0 0.0
  %476 = vmatprep.subr.mxu0 0.0
  %477 = vmatpush1.msra.mxu0 0.0
  %478 = vmatprep.subr.mxu0 0.0
  %479 = vmatpush1.msra.mxu0 0.0
  %480 = vmatprep.subr.mxu0 0.0
  %481 = vmatpush1.msra.mxu0 0.0
  %482 = vmatprep.subr.mxu0 0.0
  %483 = vmatpush1.msra.mxu0 0.0
  %484 = vmatprep.subr.mxu0 0.0
  %485 = vmatpush1.msra.mxu0 0.0
  %486 = vmatprep.subr.mxu0 %v382
  %487 = vmatpush1.msra.mxu0 %v381
  %488 = vmatprep.subr.mxu0 %v378
  %489 = vmatpush1.msra.mxu0 %v377
  %490 = vmatprep.subr.mxu0 %v374
  %491 = vmatpush1.msra.mxu0 %v373
  %492 = vmatprep.subr.mxu0 %v370
  %493 = vmatpush1.msra.mxu0 %v369
  %494 = vmatprep.subr.mxu0 0.0
  %495 = vmatpush2.msra.mxu0 0.0
  %496 = vmatprep.subr.mxu0 0.0
  %497 = vmatpush2.msra.mxu0 0.0
  %498 = vmatprep.subr.mxu0 0.0
  %499 = vmatpush2.msra.mxu0 0.0
  %500 = vmatprep.subr.mxu0 0.0
  %501 = vmatpush2.msra.mxu0 0.0
  %502 = vmatprep.subr.mxu0 0.0
  %503 = vmatpush2.msra.mxu0 0.0
  %504 = vmatprep.subr.mxu0 0.0
  %505 = vmatpush2.msra.mxu0 0.0
  %506 = vmatprep.subr.mxu0 0.0
  %507 = vmatpush2.msra.mxu0 0.0
  %508 = vmatprep.subr.mxu0 0.0
  %509 = vmatpush2.msra.mxu0 0.0
  %510 = vmatprep.subr.mxu0 0.0
  %511 = vmatpush2.msra.mxu0 0.0
  %512 = vmatprep.subr.mxu0 0.0
  %513 = vmatpush2.msra.mxu0 0.0
  %514 = vmatprep.subr.mxu0 0.0
  %515 = vmatpush2.msra.mxu0 0.0
  %516 = vmatprep.subr.mxu0 0.0
  %517 = vmatpush2.msra.mxu0 0.0
  %518 = vmatprep.subr.mxu0 0.0
  %519 = vmatpush2.msra.mxu0 0.0
  %520 = vmatprep.subr.mxu0 0.0
  %521 = vmatpush2.msra.mxu0 0.0
  %522 = vmatprep.subr.mxu0 0.0
  %523 = vmatpush2.msra.mxu0 0.0
  %524 = vmatprep.subr.mxu0 0.0
  %525 = vmatpush2.msra.mxu0 0.0
  %526 = vmatprep.mubr.f32.mxu0 0.0
  %527 = vmatmul.mubr.f32.gmra.mxu0 %v389
  %v528 = vpop.f32.mrf.mxu0
  %v529 = vadd.f32 %v386, %v528
  %v530 = vpop.f32.mrf.mxu0
  %v531 = vadd.f32 %v386, %v530
  %532 = vdwg.mxu0
  %v533 = vxor.u32 %v458, 2147483648
  %v534 = vxor.u32 %v460, 2147483648
  %v535 = vxor.u32 %v529, 2147483648
  %v536 = vxor.u32 %v531, 2147483648
  %v537 = vmul.f32 %v533, 1.442695
  %v538 = vpow.pop %v537
  %v539 = vmul.f32 %v534, 1.442695
  %v540 = vpow.pop %v539
  %v541 = vmul.f32 %v535, 1.442695
  %v542 = vpow.pop %v541
  %v543 = vmul.f32 %v536, 1.442695
  %v544 = vpow.pop %v543
  %v545 = vadd.f32 %v538, 1.0
  %v546 = vadd.f32 %v540, 1.0
  %v547 = vadd.f32 %v542, 1.0
  %v548 = vadd.f32 %v544, 1.0
  %v549 = vrcp.pop %v545
  %v550 = vmul.f32 1.0, %v549
  %v551 = vrcp.pop %v546
  %v552 = vmul.f32 1.0, %v551
  %v553 = vrcp.pop %v547
  %v554 = vmul.f32 1.0, %v553
  %v555 = vrcp.pop %v548
  %v556 = vmul.f32 1.0, %v555
  %v561 = vcombine.low %v550, %v552
  %v562 = vcombine.low %v554, %v556
  %v564 = vunpack.c.l.s4 1966171168
  %v565 = vunpack.c.0.s8 %v564
  %v566 = vlaneseq
  %v567 = vshrl.u32 %v566, 7
  %v568 = vsub.s32 %v565, %v567
  %v569 = vrot.slane %v561, %v568
  %v571 = vunpack.c.l.s4 1966171168
  %v572 = vunpack.c.0.s8 %v571
  %v573 = vlaneseq
  %v574 = vshrl.u32 %v573, 7
  %v575 = vsub.s32 %v572, %v574
  %v576 = vrot.slane %v562, %v575
  %v577 = vcombine.low %v569, %v576
  %v579 = vunpack.c.l.s4 1966171168
  %v580 = vunpack.c.0.s8 %v579
  %v581 = vlaneseq
  %v582 = vshrl.u32 %v581, 7
  %v583 = vsub.s32 %v580, %v582
  %v584 = vrot.slane %v577, %v583
  %v586 = vlaneseq
  %vm587 = vcmp.ge.s32.totalorder %v586, 0
  %vm588 = vcmp.lt.s32.totalorder %v586, 512
  %vm589 = vmand %vm587, %vm588
  %590 = vst.msk [vmem:[%s7] sm:$0xf] %vm589, %v584
  %v591 = vmax.f32 %v458, 0.0
  %v592 = vmax.f32 %v460, 0.0
  %v593 = vmax.f32 %v529, 0.0
  %v594 = vmax.f32 %v531, 0.0
  %v599 = vcombine.low %v591, %v592
  %v600 = vcombine.low %v593, %v594
  %v602 = vunpack.c.l.s4 1966171168
  %v603 = vunpack.c.0.s8 %v602
  %v604 = vlaneseq
  %v605 = vshrl.u32 %v604, 7
  %v606 = vsub.s32 %v603, %v605
  %v607 = vrot.slane %v599, %v606
  %v609 = vunpack.c.l.s4 1966171168
  %v610 = vunpack.c.0.s8 %v609
  %v611 = vlaneseq
  %v612 = vshrl.u32 %v611, 7
  %v613 = vsub.s32 %v610, %v612
  %v614 = vrot.slane %v600, %v613
  %v615 = vcombine.high %v607, %v614
  %v617 = vunpack.c.l.s4 1966171168
  %v618 = vunpack.c.0.s8 %v617
  %v619 = vlaneseq
  %v620 = vshrl.u32 %v619, 7
  %v621 = vsub.s32 %v618, %v620
  %v622 = vrot.slane %v615, %v621
  %624 = vst.msk [vmem:[%s8] sm:$0xf] %vm589, %v622
  // Predicated region
  $region30: #{policy_net_forward.1} parent=0 // pred_check
    _
  $region31: #{policy_net_forward.1} parent=0 // pred_check_branch
    %626 = sbr.rel (0) target = $region33
  $region32: #{policy_net_forward.1} parent=0 // pred_region
    _
  $region33: #{policy_net_forward.1} parent=0 // pred_fallthru
    _
  // Predicated region
  $region34: #{policy_net_forward.1} parent=0 // pred_check
    _
  $region35: #{policy_net_forward.1} parent=0 // pred_check_branch
    %628 = sbr.rel (0) target = $region37
  $region36: #{policy_net_forward.1} parent=0 // pred_region
    _
  $region37: #{policy_net_forward.1} parent=0 // pred_fallthru
    _
  // Predicated region
  $region38: #{policy_net_forward.1} parent=0 // pred_check
    _
  $region39: #{policy_net_forward.1} parent=0 // pred_check_branch
    %630 = sbr.rel (0) target = $region41
  $region40: #{policy_net_forward.1} parent=0 // pred_region
    _
  $region41: #{policy_net_forward.1} parent=0 // pred_fallthru
    _
  // Predicated region
  $region42: #{policy_net_forward.1} parent=0 // pred_check
    _
  $region43: #{policy_net_forward.1} parent=0 // pred_check_branch
    %632 = sbr.rel (0) target = $region45
  $region44: #{policy_net_forward.1} parent=0 // pred_region
    _
  $region45: #{policy_net_forward.1} parent=0 // pred_fallthru
    _

</llo_original>
